<compile_context>
chip_gen: v7x
topology: tpu7x:2x2x1
jax: 0.10.0
libtpu: 0.0.40
codegen_flags: <defaults>
</compile_context>

<pallas_src>
import functools
import math

import jax
import jax.numpy as jnp
from jax import lax
from jax.experimental import pallas as pl
from jax.experimental.pallas import tpu as pltpu


def _round_up(x, m):
    return ((x + m - 1) // m) * m


def _pad_axis(x, axis, new_size):
    pad = new_size - x.shape[axis]
    if pad == 0:
        return x
    widths = [(0, 0)] * x.ndim
    widths[axis] = (0, pad)
    return jnp.pad(x, widths)


def _pick_q_subtile(tq, tk, h, budget_bytes=256 * 1024):
    """Largest multiple of 8 dividing tq s.t. the (qs, h, tk) f32 tanh block fits budget.

    Budget lowered to 256 KiB (perf review): keeps pre/tanh/product register-friendly
    so they do not round-trip VMEM through the single vector-store slot.
    """
    best = 8
    for cand in range(8, tq + 1, 8):
        if tq % cand == 0 and cand * tk * h * 4 <= budget_bytes:
            best = cand
    return best


def _single_buffer_spec(block_shape, index_map):
    """BlockSpec with one pipeline buffer (block index is constant within a batch row,
    so a second buffer is pure VMEM waste — matters on v7x's 64 MiB VMEM)."""
    try:
        return pl.BlockSpec(block_shape, index_map, pipeline_mode=pl.Buffered(1))
    except (TypeError, AttributeError):  # older/newer API without pipeline_mode
        return pl.BlockSpec(block_shape, index_map)


def additive_attention_kernel(q_ref, kT_ref, v_ref,
                              wq_ref, bq_ref, wkT_ref, bk_ref, vparam_ref,
                              ctx_ref, attn_ref,
                              qproj_sc, kprojT_sc, e_sc,
                              *, lk_valid, tk, qs, use_bf16_tanh):
    """One grid step == one (batch, query-tile). All refs live in VMEM.

    Layouts: kprojT_sc (H, Lk_p)  — keys on lanes -> lane-dense tanh blocks
             qproj_sc  (TQ, H)
             e_sc      (TQ, Lk_p)
    """
    tq, h = qproj_sc.shape
    lk_p = kprojT_sc.shape[1]
    n_k_tiles = lk_p // tk
    n_q_sub = tq // qs

    # ---- Key projection once per batch row (qi == 0), reused by later query tiles.
    #      kprojT = Wk^T @ K^T + bk  -> (H, Lk_p), lane-dense.  Requires the qi grid
    #      axis to be "arbitrary" (sequential) so the scratch is legal to reuse.
    @pl.when(pl.program_id(1) == 0)
    def _():
        kprojT_sc[...] = (jnp.dot(wkT_ref[...], kT_ref[0],
                                  preferred_element_type=jnp.float32)
                          + bk_ref[...])                      # bk: (H, 1), lane-broadcast

    # ---- Query projection for this tile (MXU).  bq_ref already holds bq + b (the
    #      Bahdanau bias is folded in the wrapper), so the 3-D stage is a single add.
    qproj_sc[...] = (jnp.dot(q_ref[0], wq_ref[...],
                             preferred_element_type=jnp.float32) + bq_ref[...])

    # Hoisted broadcast of the v parameter (JAX does not CSE broadcast_in_dim in loops).
    v_b = jnp.broadcast_to(vparam_ref[...], (h, tk))          # (H, tk): v[h] per sublane

    # ---- Bahdanau energies, lane-dense: pre is (qs, H, tk) with tk = 128 on lanes and
    #      H on sublanes, so every vreg of the EUP-bound tanh loop is fully utilized.
    def q_sub_body(qt, carry):
        q_off = pl.multiple_of(qt * qs, qs)
        q_chunk = qproj_sc[pl.ds(q_off, qs), :]               # (qs, H)
        q_col = q_chunk[:, :, None]                           # (qs, H, 1); hoisted out of k loop

        def k_tile_body(kt, carry_in):
            k_off = pl.multiple_of(kt * tk, tk)
            key_t = kprojT_sc[:, pl.ds(k_off, tk)]            # (H, tk), lane-dense
            pre = q_col + key_t[None, :, :]                   # (qs, H, tk)
            if use_bf16_tanh:
                # ~2x EUP throughput on v6e/v7x; adds + reduction stay in f32.
                t = jnp.tanh(pre.astype(jnp.bfloat16)).astype(jnp.float32)
            else:
                t = jnp.tanh(pre)
            e_chunk = jnp.sum(t * v_b[None, :, :], axis=1)    # (qs, tk), sublane reduce
            e_sc[pl.ds(q_off, qs), pl.ds(k_off, tk)] = e_chunk
            return carry_in

        return lax.fori_loop(0, n_k_tiles, k_tile_body, carry)

    lax.fori_loop(0, n_q_sub, q_sub_body, 0)

    # ---- Softmax over keys (mask padded key columns), then attn @ V on the MXU.
    energies = e_sc[...]                                      # (tq, lk_p)
    if lk_valid < lk_p:  # static
        col = lax.broadcasted_iota(jnp.int32, (tq, lk_p), 1)
        energies = jnp.where(col < lk_valid, energies, jnp.float32(-1e30))
    m = jnp.max(energies, axis=-1, keepdims=True)
    p = jnp.exp(energies - m)
    denom = jnp.sum(p, axis=-1, keepdims=True)
    attn = p * pl.reciprocal(denom, approx=False)             # exact: rows sum to 1

    attn_ref[0] = attn
    # torch.bmm(attn_weights, V) — raw V (value_proj is unused in the module's forward).
    ctx_ref[0] = jnp.dot(attn, v_ref[0], preferred_element_type=jnp.float32)


def additive_attention(Q, K, V, params, *, use_bf16_tanh=False, tq_max=128):
    B, Lq, Dq = Q.shape
    _, Lk, Dk = K.shape
    Dv = V.shape[-1]
    H = params["wq"].shape[1]

    TK = 128                                      # key tile: lane-dense energies/attn
    # On v5e/v6e with large Lq, tq_max=256 amortizes per-step overhead; keep 128 on v7x.
    TQ = min(tq_max, _round_up(Lq, 8))
    H_p = _round_up(H, 8)                         # hidden dim on sublanes
    QS = _pick_q_subtile(TQ, TK, H_p)
    Lq_p = _round_up(Lq, TQ)
    Lk_p = _round_up(Lk, TK)

    Qp = _pad_axis(Q, 1, Lq_p)
    KpT = jnp.swapaxes(_pad_axis(K, 1, Lk_p), 1, 2)                 # (B, Dk, Lk_p)
    Vp = _pad_axis(V, 1, Lk_p)

    # Fold the Bahdanau bias b into the query bias; key-side params are passed
    # transposed so the key projection lands directly in (H, Lk_p) lane-dense form.
    wq = _pad_axis(params["wq"], 1, H_p)                            # (Dq, H_p)
    bq_eff = _pad_axis(params["bq"] + params["b"], 1, H_p)          # (1, H_p)
    wkT = jnp.swapaxes(_pad_axis(params["wk"], 1, H_p), 0, 1)       # (H_p, Dk)
    bk_col = jnp.swapaxes(_pad_axis(params["bk"], 1, H_p), 0, 1)    # (H_p, 1)
    v_col = jnp.swapaxes(_pad_axis(params["v"], 1, H_p), 0, 1)      # (H_p, 1)

    grid = (B, Lq_p // TQ)
    kernel = functools.partial(additive_attention_kernel,
                               lk_valid=Lk, tk=TK, qs=QS,
                               use_bf16_tanh=use_bf16_tanh)

    grid_spec = pltpu.PrefetchScalarGridSpec(
        num_scalar_prefetch=0,
        grid=grid,
        in_specs=[
            pl.BlockSpec((1, TQ, Dq), lambda b, qi: (b, qi, 0)),        # Q tile
            _single_buffer_spec((1, Dk, Lk_p), lambda b, qi: (b, 0, 0)),  # K^T (whole row)
            _single_buffer_spec((1, Lk_p, Dv), lambda b, qi: (b, 0, 0)),  # V   (whole row)
            pl.BlockSpec((Dq, H_p), lambda b, qi: (0, 0)),              # Wq
            pl.BlockSpec((1, H_p), lambda b, qi: (0, 0)),               # bq + b (folded)
            pl.BlockSpec((H_p, Dk), lambda b, qi: (0, 0)),              # Wk^T
            pl.BlockSpec((H_p, 1), lambda b, qi: (0, 0)),               # bk column
            pl.BlockSpec((H_p, 1), lambda b, qi: (0, 0)),               # v column
        ],
        out_specs=[
            pl.BlockSpec((1, TQ, Dv), lambda b, qi: (b, qi, 0)),        # context
            pl.BlockSpec((1, TQ, Lk_p), lambda b, qi: (b, qi, 0)),      # attn (lane-dense)
        ],
        scratch_shapes=[
            pltpu.VMEM((TQ, H_p), jnp.float32),       # projected query tile
            pltpu.VMEM((H_p, Lk_p), jnp.float32),     # projected keys (transposed)
            pltpu.VMEM((TQ, Lk_p), jnp.float32),      # energies
        ],
    )

    ctx_p, attn_p = pl.pallas_call(
        kernel,
        grid_spec=grid_spec,
        out_shape=(
            jax.ShapeDtypeStruct((B, Lq_p, Dv), jnp.float32),
            jax.ShapeDtypeStruct((B, Lq_p, Lk_p), jnp.float32),
        ),
        compiler_params=pltpu.CompilerParams(
            # B "parallel" (megacore shards batches); qi "arbitrary" so the key-projection
            # scratch written at qi == 0 is legal to reuse at qi > 0 (documented ~0% cost).
            dimension_semantics=("parallel", "arbitrary"),
            vmem_limit_bytes=32 * 1024 * 1024,
        ),
    )(Qp, KpT, Vp, wq, bq_eff, wkT, bk_col, v_col)

    # Strip query/key padding.
    return ctx_p[:, :Lq, :], attn_p[:, :Lq, :Lk]


def init_params(key, query_dim, key_dim, value_dim, hidden_dim):
    """Deterministic parameter init mirroring the PyTorch __init__ shapes."""
    ks = jax.random.split(key, 7)

    def linear_init(kw, kb, in_dim, out_dim):
        bound = 1.0 / math.sqrt(in_dim)
        w = jax.random.uniform(kw, (in_dim, out_dim), jnp.float32, -bound, bound)
        b = jax.random.uniform(kb, (1, out_dim), jnp.float32, -bound, bound)
        return w, b

    wq, bq = linear_init(ks[0], ks[1], query_dim, hidden_dim)
    wk, bk = linear_init(ks[2], ks[3], key_dim, hidden_dim)
    # value_proj exists in the PyTorch module but is unused in forward();
    # created here only for parity, never passed to the kernel.
    wv, bv = linear_init(ks[4], ks[5], value_dim, hidden_dim)

    stdv = 1.0 / math.sqrt(hidden_dim)
    v = jax.random.uniform(ks[6], (1, hidden_dim), jnp.float32, -stdv, stdv)
    b = jnp.zeros((1, hidden_dim), jnp.float32)

    return {"wq": wq, "bq": bq, "wk": wk, "bk": bk,
            "wv": wv, "bv": bv, "v": v, "b": b}


def additive_attention_ref(Q, K, V, params):
    """Pure-JAX reference mirroring the PyTorch forward (mask=None path)."""
    query = Q @ params["wq"] + params["bq"]            # (B, Lq, H)
    key = K @ params["wk"] + params["bk"]              # (B, Lk, H)
    pre = query[:, :, None, :] + key[:, None, :, :] + params["b"][None]
    energies = jnp.sum(params["v"][None] * jnp.tanh(pre), axis=-1)
    attn = jax.nn.softmax(energies, axis=-1)
    ctx = jnp.einsum("bqk,bkd->bqd", attn, V)
    return ctx, attn


def _run_case(seed, B, Lq, Lk, query_dim, key_dim, value_dim, hidden_dim,
              use_bf16_tanh=False, tol=2e-3):
    root = jax.random.PRNGKey(seed)
    k_p, k_q, k_k, k_v = jax.random.split(root, 4)

    params = init_params(k_p, query_dim, key_dim, value_dim, hidden_dim)
    Q = jax.random.normal(k_q, (B, Lq, query_dim), jnp.float32)
    K = jax.random.normal(k_k, (B, Lk, key_dim), jnp.float32)
    V = jax.random.normal(k_v, (B, Lk, value_dim), jnp.float32)

    ctx, attn = additive_attention(Q, K, V, params, use_bf16_tanh=use_bf16_tanh)
    jax.block_until_ready((ctx, attn))

    ctx_exp, attn_exp = additive_attention_ref(Q, K, V, params)
    assert ctx.shape == (B, Lq, value_dim) and attn.shape == (B, Lq, Lk)
    assert jnp.allclose(ctx, ctx_exp, atol=tol, rtol=tol), \
        float(jnp.max(jnp.abs(ctx - ctx_exp)))
    assert jnp.allclose(attn, attn_exp, atol=tol, rtol=tol), \
        float(jnp.max(jnp.abs(attn - attn_exp)))


if __name__ == "__main__":
    # Small case: exercises key-axis padding + masking of padded key columns.
    _run_case(0, B=2, Lq=8, Lk=16, query_dim=32, key_dim=32, value_dim=32, hidden_dim=32)
    # Multi-tile case: >1 query grid tile (pl.when-gated key projection is reused),
    # >1 key tile and >1 query sub-tile inside the kernel.
    _run_case(0, B=2, Lq=160, Lk=200, query_dim=48, key_dim=40, value_dim=24, hidden_dim=64)
    # Optional bf16-tanh path (the ~2x EUP win on v6e/v7x). Looser tolerance because
    # tanh inputs/outputs are rounded to bf16; softmax/accumulation stay in f32.
    _run_case(0, B=2, Lq=8, Lk=16, query_dim=32, key_dim=32, value_dim=32, hidden_dim=32,
              use_bf16_tanh=True, tol=3e-2)
    print("KERNEL_OK")
</pallas_src>

<mosaic_0001>
module attributes {stable_mosaic.version = 11 : i64} {
  func.func @additive_attention_kernel(%arg0: i32, %arg1: i32, %arg2: memref<1x8x32xf32, #tpu.memory_space<vmem>>, %arg3: memref<1x32x128xf32, #tpu.memory_space<vmem>>, %arg4: memref<1x128x32xf32, #tpu.memory_space<vmem>>, %arg5: memref<32x32xf32, #tpu.memory_space<vmem>>, %arg6: memref<1x32xf32, #tpu.memory_space<vmem>>, %arg7: memref<32x32xf32, #tpu.memory_space<vmem>>, %arg8: memref<32x1xf32, #tpu.memory_space<vmem>>, %arg9: memref<32x1xf32, #tpu.memory_space<vmem>>, %arg10: memref<1x8x32xf32, #tpu.memory_space<vmem>>, %arg11: memref<1x8x128xf32, #tpu.memory_space<vmem>>, %arg12: memref<8x32xf32, #tpu.memory_space<vmem>>, %arg13: memref<32x128xf32, #tpu.memory_space<vmem>>, %arg14: memref<8x128xf32, #tpu.memory_space<vmem>>) attributes {dimension_semantics = [#tpu.dimension_semantics<parallel>, #tpu.dimension_semantics<arbitrary>], iteration_bounds = array<i64: 2, 1>, scalar_prefetch = 0 : i64, scratch_operands = 3 : i64, tpu.core_type = #tpu.core_type<tc>, window_params = [{transform_indices = @transform_0, window_bounds = array<i64: 1, 8, 32>}, {pipeline_mode = #tpu.pipeline_mode<synchronous>, transform_indices = @transform_1, window_bounds = array<i64: 1, 32, 128>}, {pipeline_mode = #tpu.pipeline_mode<synchronous>, transform_indices = @transform_2, window_bounds = array<i64: 1, 128, 32>}, {pipeline_mode = #tpu.pipeline_mode<synchronous>, transform_indices = @transform_3, window_bounds = array<i64: 32, 32>}, {pipeline_mode = #tpu.pipeline_mode<synchronous>, transform_indices = @transform_4, window_bounds = array<i64: 1, 32>}, {pipeline_mode = #tpu.pipeline_mode<synchronous>, transform_indices = @transform_5, window_bounds = array<i64: 32, 32>}, {pipeline_mode = #tpu.pipeline_mode<synchronous>, transform_indices = @transform_6, window_bounds = array<i64: 32, 1>}, {pipeline_mode = #tpu.pipeline_mode<synchronous>, transform_indices = @transform_7, window_bounds = array<i64: 32, 1>}, {transform_indices = @transform_8, window_bounds = array<i64: 1, 8, 32>}, {transform_indices = @transform_9, window_bounds = array<i64: 1, 8, 128>}]} {
    %c0_i32 = arith.constant 0 : i32
    %0 = arith.cmpi eq, %arg1, %c0_i32 : i32
    %1 = arith.extui %0 : i1 to i32
    %c0_i32_0 = arith.constant 0 : i32
    %2 = arith.cmpi ne, %1, %c0_i32_0 : i32
    scf.if %2 {
      %c0_32 = arith.constant 0 : index
      %c0_33 = arith.constant 0 : index
      %60 = vector.load %arg7[%c0_32, %c0_33] : memref<32x32xf32, #tpu.memory_space<vmem>>, vector<32x32xf32>
      %c0_34 = arith.constant 0 : index
      %c0_35 = arith.constant 0 : index
      %c0_36 = arith.constant 0 : index
      %61 = vector.load %arg3[%c0_34, %c0_35, %c0_36] : memref<1x32x128xf32, #tpu.memory_space<vmem>>, vector<1x32x128xf32>
      %62 = vector.shape_cast %61 : vector<1x32x128xf32> to vector<32x128xf32>
      %cst_37 = arith.constant dense<0.000000e+00> : vector<32x128xf32>
      %63 = tpu.matmul %60, %62, %cst_37 {dimension_numbers = #tpu.dot_dimension_numbers<[1], [0], [0], [1], [0, 0, 1, 1], [], []>} : vector<32x32xf32>, vector<32x128xf32>, vector<32x128xf32> -> vector<32x128xf32>
      %c0_38 = arith.constant 0 : index
      %c0_39 = arith.constant 0 : index
      %64 = vector.load %arg8[%c0_38, %c0_39] : memref<32x1xf32, #tpu.memory_space<vmem>>, vector<32x1xf32>
      %65 = vector.broadcast %64 : vector<32x1xf32> to vector<32x128xf32>
      %66 = arith.addf %63, %65 : vector<32x128xf32>
      %c0_40 = arith.constant 0 : index
      %c0_41 = arith.constant 0 : index
      %67 = vector.load %arg13[%c0_40, %c0_41] : memref<32x128xf32, #tpu.memory_space<vmem>>, vector<32x128xf32>
      tpu.vector_store %arg13[%c0_40, %c0_41], %66 {strides = array<i32>} : memref<32x128xf32, #tpu.memory_space<vmem>>, vector<32x128xf32>,
    } else {
    }
    %c0 = arith.constant 0 : index
    %c0_1 = arith.constant 0 : index
    %c0_2 = arith.constant 0 : index
    %3 = vector.load %arg2[%c0, %c0_1, %c0_2] : memref<1x8x32xf32, #tpu.memory_space<vmem>>, vector<1x8x32xf32>
    %4 = vector.shape_cast %3 : vector<1x8x32xf32> to vector<8x32xf32>
    %c0_3 = arith.constant 0 : index
    %c0_4 = arith.constant 0 : index
    %5 = vector.load %arg5[%c0_3, %c0_4] : memref<32x32xf32, #tpu.memory_space<vmem>>, vector<32x32xf32>
    %cst = arith.constant dense<0.000000e+00> : vector<8x32xf32>
    %6 = tpu.matmul %4, %5, %cst {dimension_numbers = #tpu.dot_dimension_numbers<[1], [0], [0], [1], [0, 0, 1, 1], [], []>} : vector<8x32xf32>, vector<32x32xf32>, vector<8x32xf32> -> vector<8x32xf32>
    %c0_5 = arith.constant 0 : index
    %c0_6 = arith.constant 0 : index
    %7 = vector.load %arg6[%c0_5, %c0_6] : memref<1x32xf32, #tpu.memory_space<vmem>>, vector<1x32xf32>
    %8 = vector.broadcast %7 : vector<1x32xf32> to vector<8x32xf32>
    %9 = arith.addf %6, %8 : vector<8x32xf32>
    %c0_7 = arith.constant 0 : index
    %c0_8 = arith.constant 0 : index
    %10 = vector.load %arg12[%c0_7, %c0_8] : memref<8x32xf32, #tpu.memory_space<vmem>>, vector<8x32xf32>
    tpu.vector_store %arg12[%c0_7, %c0_8], %9 {strides = array<i32>} : memref<8x32xf32, #tpu.memory_space<vmem>>, vector<8x32xf32>,
    %c0_9 = arith.constant 0 : index
    %c0_10 = arith.constant 0 : index
    %11 = vector.load %arg9[%c0_9, %c0_10] : memref<32x1xf32, #tpu.memory_space<vmem>>, vector<32x1xf32>
    %12 = vector.shape_cast %11 : vector<32x1xf32> to vector<32x1xf32>
    %13 = vector.broadcast %12 : vector<32x1xf32> to vector<32x128xf32>
    %c0_i32_11 = arith.constant 0 : i32
    %c8_i32 = arith.constant 8 : i32
    %14 = arith.muli %c0_i32_11, %c8_i32 : i32
    %15 = tpu.assume_multiple %14, 8 : i32
    %16 = arith.index_cast %15 : i32 to index
    %c0_12 = arith.constant 0 : index
    %17 = vector.load %arg12[%16, %c0_12] : memref<8x32xf32, #tpu.memory_space<vmem>>, vector<8x32xf32>
    %18 = vector.shape_cast %17 : vector<8x32xf32> to vector<8x32x1xf32>
    %c0_i32_13 = arith.constant 0 : i32
    %c128_i32 = arith.constant 128 : i32
    %19 = arith.muli %c0_i32_13, %c128_i32 : i32
    %20 = tpu.assume_multiple %19, 128 : i32
    %c0_14 = arith.constant 0 : index
    %21 = arith.index_cast %20 : i32 to index
    %22 = vector.load %arg13[%c0_14, %21] : memref<32x128xf32, #tpu.memory_space<vmem>>, vector<32x128xf32>
    %23 = vector.shape_cast %22 : vector<32x128xf32> to vector<1x32x128xf32>
    %24 = vector.broadcast %18 : vector<8x32x1xf32> to vector<8x32x128xf32>
    %25 = vector.broadcast %23 : vector<1x32x128xf32> to vector<8x32x128xf32>
    %26 = arith.addf %24, %25 : vector<8x32x128xf32>
    %27 = math.tanh %26 : vector<8x32x128xf32>
    %28 = vector.shape_cast %13 : vector<32x128xf32> to vector<1x32x128xf32>
    %29 = vector.broadcast %28 : vector<1x32x128xf32> to vector<8x32x128xf32>
    %30 = arith.mulf %27, %29 : vector<8x32x128xf32>
    %cst_15 = arith.constant dense<0.000000e+00> : vector<8x128xf32>
    %31 = vector.multi_reduction <add>, %30, %cst_15 [1] : vector<8x32x128xf32> to vector<8x128xf32>
    %32 = arith.index_cast %15 : i32 to index
    %33 = arith.index_cast %20 : i32 to index
    %34 = vector.load %arg14[%32, %33] : memref<8x128xf32, #tpu.memory_space<vmem>>, vector<8x128xf32>
    tpu.vector_store %arg14[%32, %33], %31 {strides = array<i32>} : memref<8x128xf32, #tpu.memory_space<vmem>>, vector<8x128xf32>,
    %c1_i32 = arith.constant 1 : i32
    %c1_i32_16 = arith.constant 1 : i32
    %c0_17 = arith.constant 0 : index
    %c0_18 = arith.constant 0 : index
    %35 = vector.load %arg14[%c0_17, %c0_18] : memref<8x128xf32, #tpu.memory_space<vmem>>, vector<8x128xf32>
    %36 = tpu.iota {dimensions = array<i32: 1>} : vector<8x128xi32>
    %c16_i32 = arith.constant 16 : i32
    %37 = vector.broadcast %c16_i32 : i32 to vector<8x128xi32>
    %38 = arith.cmpi slt, %36, %37 : vector<8x128xi32>
    %cst_19 = arith.constant -1.000000e+30 : f32
    %39 = vector.broadcast %cst_19 : f32 to vector<8x128xf32>
    %40 = arith.select %38, %35, %39 : vector<8x128xi1>, vector<8x128xf32>
    %cst_20 = arith.constant dense<0xFF800000> : vector<8xf32>
    %41 = vector.multi_reduction <maximumf>, %40, %cst_20 [1] : vector<8x128xf32> to vector<8xf32>
    %42 = vector.shape_cast %41 : vector<8xf32> to vector<8x1xf32>
    %43 = vector.broadcast %42 : vector<8x1xf32> to vector<8x128xf32>
    %44 = arith.subf %40, %43 : vector<8x128xf32>
    %45 = math.exp %44 : vector<8x128xf32>
    %cst_21 = arith.constant dense<0.000000e+00> : vector<8xf32>
    %46 = vector.multi_reduction <add>, %45, %cst_21 [1] : vector<8x128xf32> to vector<8xf32>
    %47 = vector.shape_cast %46 : vector<8xf32> to vector<8x1xf32>
    %48 = tpu.reciprocal %47 : vector<8x1xf32> -> vector<8x1xf32>
    %49 = vector.broadcast %48 : vector<8x1xf32> to vector<8x128xf32>
    %50 = arith.mulf %45, %49 : vector<8x128xf32>
    %c0_22 = arith.constant 0 : index
    %c0_23 = arith.constant 0 : index
    %c0_24 = arith.constant 0 : index
    %51 = vector.load %arg11[%c0_22, %c0_23, %c0_24] : memref<1x8x128xf32, #tpu.memory_space<vmem>>, vector<1x8x128xf32>
    %52 = vector.shape_cast %51 : vector<1x8x128xf32> to vector<8x128xf32>
    %53 = vector.shape_cast %50 : vector<8x128xf32> to vector<1x8x128xf32>
    tpu.vector_store %arg11[%c0_22, %c0_23, %c0_24], %53 {strides = array<i32>} : memref<1x8x128xf32, #tpu.memory_space<vmem>>, vector<1x8x128xf32>,
    %c0_25 = arith.constant 0 : index
    %c0_26 = arith.constant 0 : index
    %c0_27 = arith.constant 0 : index
    %54 = vector.load %arg4[%c0_25, %c0_26, %c0_27] : memref<1x128x32xf32, #tpu.memory_space<vmem>>, vector<1x128x32xf32>
    %55 = vector.shape_cast %54 : vector<1x128x32xf32> to vector<128x32xf32>
    %cst_28 = arith.constant dense<0.000000e+00> : vector<8x32xf32>
    %56 = tpu.matmul %50, %55, %cst_28 {dimension_numbers = #tpu.dot_dimension_numbers<[1], [0], [0], [1], [0, 0, 1, 1], [], []>} : vector<8x128xf32>, vector<128x32xf32>, vector<8x32xf32> -> vector<8x32xf32>
    %c0_29 = arith.constant 0 : index
    %c0_30 = arith.constant 0 : index
    %c0_31 = arith.constant 0 : index
    %57 = vector.load %arg10[%c0_29, %c0_30, %c0_31] : memref<1x8x32xf32, #tpu.memory_space<vmem>>, vector<1x8x32xf32>
    %58 = vector.shape_cast %57 : vector<1x8x32xf32> to vector<8x32xf32>
    %59 = vector.shape_cast %56 : vector<8x32xf32> to vector<1x8x32xf32>
    tpu.vector_store %arg10[%c0_29, %c0_30, %c0_31], %59 {strides = array<i32>} : memref<1x8x32xf32, #tpu.memory_space<vmem>>, vector<1x8x32xf32>,
    return
  }
  func.func @transform_0(%arg0: i32, %arg1: i32) -> (i32, i32, i32) {
    %c0_i32 = arith.constant 0 : i32
    %c0_i32_0 = arith.constant 0 : i32
    return %arg0, %arg1, %c0_i32 : i32, i32, i32
  }
  func.func @transform_1(%arg0: i32, %arg1: i32) -> (i32, i32, i32) {
    %c0_i32 = arith.constant 0 : i32
    %c0_i32_0 = arith.constant 0 : i32
    %c0_i32_1 = arith.constant 0 : i32
    return %arg0, %c0_i32, %c0_i32_0 : i32, i32, i32
  }
  func.func @transform_2(%arg0: i32, %arg1: i32) -> (i32, i32, i32) {
    %c0_i32 = arith.constant 0 : i32
    %c0_i32_0 = arith.constant 0 : i32
    %c0_i32_1 = arith.constant 0 : i32
    return %arg0, %c0_i32, %c0_i32_0 : i32, i32, i32
  }
  func.func @transform_3(%arg0: i32, %arg1: i32) -> (i32, i32) {
    %c0_i32 = arith.constant 0 : i32
    %c0_i32_0 = arith.constant 0 : i32
    %c0_i32_1 = arith.constant 0 : i32
    return %c0_i32, %c0_i32_0 : i32, i32
  }
  func.func @transform_4(%arg0: i32, %arg1: i32) -> (i32, i32) {
    %c0_i32 = arith.constant 0 : i32
    %c0_i32_0 = arith.constant 0 : i32
    %c0_i32_1 = arith.constant 0 : i32
    return %c0_i32, %c0_i32_0 : i32, i32
  }
  func.func @transform_5(%arg0: i32, %arg1: i32) -> (i32, i32) {
    %c0_i32 = arith.constant 0 : i32
    %c0_i32_0 = arith.constant 0 : i32
    %c0_i32_1 = arith.constant 0 : i32
    return %c0_i32, %c0_i32_0 : i32, i32
  }
  func.func @transform_6(%arg0: i32, %arg1: i32) -> (i32, i32) {
    %c0_i32 = arith.constant 0 : i32
    %c0_i32_0 = arith.constant 0 : i32
    %c0_i32_1 = arith.constant 0 : i32
    return %c0_i32, %c0_i32_0 : i32, i32
  }
  func.func @transform_7(%arg0: i32, %arg1: i32) -> (i32, i32) {
    %c0_i32 = arith.constant 0 : i32
    %c0_i32_0 = arith.constant 0 : i32
    %c0_i32_1 = arith.constant 0 : i32
    return %c0_i32, %c0_i32_0 : i32, i32
  }
  func.func @transform_8(%arg0: i32, %arg1: i32) -> (i32, i32, i32) {
    %c0_i32 = arith.constant 0 : i32
    %c0_i32_0 = arith.constant 0 : i32
    return %arg0, %arg1, %c0_i32 : i32, i32, i32
  }
  func.func @transform_9(%arg0: i32, %arg1: i32) -> (i32, i32, i32) {
    %c0_i32 = arith.constant 0 : i32
    %c0_i32_0 = arith.constant 0 : i32
    return %arg0, %arg1, %c0_i32 : i32, i32, i32
  }
}

</mosaic_0001>

<llo_original>
// kernel: tpu_custom_call.1
$region0: #{tpu_custom_call.1}
  #allocation0 [shape = 'u32[]', space=smem, size = 0x4, offset = 0x4, fixed_abs, tag = 'smem constant byte address 0x4 - core index']
  #allocation1 [shape = 'u32[144,128]{1,0:T(1,128)}', space=vmem, size = 0x12000, scoped, tag = 'internal scratch']
  #allocation2 [shape = 'f32[8,32]{1,0:T(8,128)}', space=vmem, size = 0x1000, scoped, tag = 'scratch operand']
  #allocation3 [shape = 'f32[32,128]{1,0:T(8,128)}', space=vmem, size = 0x4000, scoped, tag = 'scratch operand']
  #allocation4 [shape = 'f32[8,128]{1,0:T(8,128)}', space=vmem, size = 0x1000, scoped, tag = 'scratch operand']
  %s0 = inlined_call_operand.vmem [shape: f32[2,8,32], index: 0, kind: input, shape index: {}]
  %s1 = inlined_call_operand.vmem [shape: f32[2,32,128], index: 1, kind: input, shape index: {}]
  %s2 = inlined_call_operand.vmem [shape: f32[2,128,32], index: 2, kind: input, shape index: {}]
  %s3 = inlined_call_operand.vmem [shape: f32[32,32], index: 3, kind: input, shape index: {}]
  %s4 = inlined_call_operand.vmem [shape: f32[1,32], index: 4, kind: input, shape index: {}]
  %s5 = inlined_call_operand.vmem [shape: f32[32,32], index: 5, kind: input, shape index: {}]
  %s6 = inlined_call_operand.vmem [shape: f32[32,1], index: 6, kind: input, shape index: {}]
  %s7 = inlined_call_operand.vmem [shape: f32[32,1], index: 7, kind: input, shape index: {}]
  %s8 = inlined_call_operand.hbm [shape: f32[2,8,32], index: 8, kind: output, shape index: {0}]
  %s9 = inlined_call_operand.hbm [shape: f32[2,8,128], index: 9, kind: output, shape index: {1}]
  %10 = xla_tuple %s8, %s9
  %s11 = sld [smem:[#allocation0]]
  $region77: #{tpu_custom_call.1} parent=0
    _
  %s13 = ssub.s32 1, %s11
  %s14 = scalar_select 0, %s13, %s11
  $region1: #{tpu_custom_call.1} parent=0
    #allocation5 [shape = 'u8[8192]{0}', space=vmem, size = 0x2000, scoped, tag = 'output window, operand 0']
    #allocation6 [shape = 's32[2]{0}', space=sflag, size = 0x8, scoped, tag = 'scoped memory for tpu_custom_call.1']
    #allocation7 [shape = 'u8[8192]{0}', space=vmem, size = 0x2000, scoped, tag = 'output window, operand 1']
    #allocation8 [shape = 's32[2]{0}', space=sflag, size = 0x8, scoped, tag = 'scoped memory for tpu_custom_call.1']
    %15 = vsyncpa [#allocation6], 0
    %s16 = scalar_lea.sflag [#allocation6], 1
    %17 = vsyncpa %s16, 0
    %18 = vsyncpa [#allocation8], 0
    %s19 = scalar_lea.sflag [#allocation8], 1
    %20 = vsyncpa %s19, 0
    loop: start=0, step=1, limit=4
    $region2: #{tpu_custom_call.1} parent=1 // loop_pre_header
      _
    $region3: #{tpu_custom_call.1} parent=1 // loop_header
      %s22 = sphi 0, %s26
      %p23 = scmp.ge.s32.totalorder %s22, 4
      %s29 = sphi 0, %s41
      %s30 = sphi 0, %s37
      %s31 = sphi 0, %s29
      %s32 = sphi 0, %s30
      %s33 = sphi 0, %s31
      %s34 = sphi 0, %s32
      %s46 = sphi 0, %s48
      %s49 = sphi 0, %s46
      %s50 = sphi 0, %s49
      %s66 = sphi 0, %s50
      %s72 = sphi 0, %s74
      %s75 = sphi 0, %s72
      %s76 = sphi 0, %s75
      %s92 = sphi 0, %s76
      %s98 = sphi 0, %s100
      %s101 = sphi 0, %s98
      %s102 = sphi 0, %s101
      %s118 = sphi 0, %s102
      %s122 = sphi 0, %s122
      %s124 = sphi 0, %s122
      %s125 = sphi 0, %s124
      %s139 = sphi 0, %s125
      %s143 = sphi 0, %s143
      %s145 = sphi 0, %s143
      %s146 = sphi 0, %s145
      %s160 = sphi 0, %s146
      %s164 = sphi 0, %s164
      %s166 = sphi 0, %s164
      %s167 = sphi 0, %s166
      %s181 = sphi 0, %s167
      %s185 = sphi 0, %s185
      %s187 = sphi 0, %s185
      %s188 = sphi 0, %s187
      %s202 = sphi 0, %s188
      %s206 = sphi 0, %s206
      %s208 = sphi 0, %s206
      %s209 = sphi 0, %s208
      %s223 = sphi 0, %s209
      %s231 = sphi 0, %s233
      %s234 = sphi 0, %s231
      %s235 = sphi 0, %s234
      %s251 = sphi 0, %s235
      %s259 = sphi 0, %s261
      %s262 = sphi 0, %s259
      %s263 = sphi 0, %s262
      %s279 = sphi 0, %s263
    $region4: #{tpu_custom_call.1} parent=1 // loop_header_branch
      %25 = sbr.rel (%p23) target = $region8
    $region5: #{tpu_custom_call.1} parent=1 // loop_body
      %s27 = ssub.s32 %s22, 1
      %s28 = ssub.s32 %s22, 2
      %s35 = sadd.s32 1, %s30
      %p36 = scmp.ge.s32.totalorder %s35, 1
      %s37 = scalar_select %p36, 0, %s35
      %s38 = sadd.s32 1, %s29
      %s39 = scalar_select %p36, %s38, %s29
      %p40 = scmp.ge.s32.totalorder %s39, 2
      %s41 = scalar_select %p40, 0, %s39
      %s42 = ssub.s32 %s29, %s41
      %s43 = ssub.s32 %s30, %s37
      %s44 = sor.u32 %s42, %s43
      %p45 = scmp.eq.s32.totalorder %s44, 0
      %s47 = sadd.s32 %s46, 1
      %s48 = scalar_select %p45, %s46, %s47
      %p51 = pneg %p45
      %p52 = scmp.eq.s32.totalorder %s22, 1
      %p53 = por %p51, %p52
      %p54 = scmp.ne.s32.totalorder %s46, %s49
      %p55 = scmp.eq.s32.totalorder %s22, 0
      %p56 = por %p54, %p55
      %p57 = scmp.ne.s32.totalorder %s46, %s49
      %p58 = scmp.eq.s32.totalorder %s27, 1
      %p59 = por %p57, %p58
      %p60 = scmp.ne.s32.totalorder %s49, %s50
      %p61 = scmp.eq.s32.totalorder %s27, 0
      %p62 = por %p60, %p61
      %p63 = scmp.ne.s32.totalorder %s49, %s50
      %p64 = scmp.eq.s32.totalorder %s28, 1
      %p65 = por %p63, %p64
      %p67 = scmp.ne.s32.totalorder %s50, %s66
      %p68 = scmp.eq.s32.totalorder %s28, 0
      %p69 = por %p67, %p68
      %s70 = ssub.s32 %s29, %s41
      %p71 = scmp.eq.s32.totalorder %s70, 0
      %s73 = sadd.s32 %s72, 1
      %s74 = scalar_select %p71, %s72, %s73
      %p77 = pneg %p71
      %p78 = scmp.eq.s32.totalorder %s22, 1
      %p79 = por %p77, %p78
      %p80 = scmp.ne.s32.totalorder %s72, %s75
      %p81 = scmp.eq.s32.totalorder %s22, 0
      %p82 = por %p80, %p81
      %p83 = scmp.ne.s32.totalorder %s72, %s75
      %p84 = scmp.eq.s32.totalorder %s27, 1
      %p85 = por %p83, %p84
      %p86 = scmp.ne.s32.totalorder %s75, %s76
      %p87 = scmp.eq.s32.totalorder %s27, 0
      %p88 = por %p86, %p87
      %p89 = scmp.ne.s32.totalorder %s75, %s76
      %p90 = scmp.eq.s32.totalorder %s28, 1
      %p91 = por %p89, %p90
      %p93 = scmp.ne.s32.totalorder %s76, %s92
      %p94 = scmp.eq.s32.totalorder %s28, 0
      %p95 = por %p93, %p94
      %s96 = ssub.s32 %s29, %s41
      %p97 = scmp.eq.s32.totalorder %s96, 0
      %s99 = sadd.s32 %s98, 1
      %s100 = scalar_select %p97, %s98, %s99
      %p103 = pneg %p97
      %p104 = scmp.eq.s32.totalorder %s22, 1
      %p105 = por %p103, %p104
      %p106 = scmp.ne.s32.totalorder %s98, %s101
      %p107 = scmp.eq.s32.totalorder %s22, 0
      %p108 = por %p106, %p107
      %p109 = scmp.ne.s32.totalorder %s98, %s101
      %p110 = scmp.eq.s32.totalorder %s27, 1
      %p111 = por %p109, %p110
      %p112 = scmp.ne.s32.totalorder %s101, %s102
      %p113 = scmp.eq.s32.totalorder %s27, 0
      %p114 = por %p112, %p113
      %p115 = scmp.ne.s32.totalorder %s101, %s102
      %p116 = scmp.eq.s32.totalorder %s28, 1
      %p117 = por %p115, %p116
      %p119 = scmp.ne.s32.totalorder %s102, %s118
      %p120 = scmp.eq.s32.totalorder %s28, 0
      %p121 = por %p119, %p120
      %s123 = sadd.s32 %s122, 1
      %p126 = scmp.eq.s32.totalorder %s22, 1
      %p127 = scmp.ne.s32.totalorder %s122, %s124
      %p128 = scmp.eq.s32.totalorder %s22, 0
      %p129 = por %p127, %p128
      %p130 = scmp.ne.s32.totalorder %s122, %s124
      %p131 = scmp.eq.s32.totalorder %s27, 1
      %p132 = por %p130, %p131
      %p133 = scmp.ne.s32.totalorder %s124, %s125
      %p134 = scmp.eq.s32.totalorder %s27, 0
      %p135 = por %p133, %p134
      %p136 = scmp.ne.s32.totalorder %s124, %s125
      %p137 = scmp.eq.s32.totalorder %s28, 1
      %p138 = por %p136, %p137
      %p140 = scmp.ne.s32.totalorder %s125, %s139
      %p141 = scmp.eq.s32.totalorder %s28, 0
      %p142 = por %p140, %p141
      %s144 = sadd.s32 %s143, 1
      %p147 = scmp.eq.s32.totalorder %s22, 1
      %p148 = scmp.ne.s32.totalorder %s143, %s145
      %p149 = scmp.eq.s32.totalorder %s22, 0
      %p150 = por %p148, %p149
      %p151 = scmp.ne.s32.totalorder %s143, %s145
      %p152 = scmp.eq.s32.totalorder %s27, 1
      %p153 = por %p151, %p152
      %p154 = scmp.ne.s32.totalorder %s145, %s146
      %p155 = scmp.eq.s32.totalorder %s27, 0
      %p156 = por %p154, %p155
      %p157 = scmp.ne.s32.totalorder %s145, %s146
      %p158 = scmp.eq.s32.totalorder %s28, 1
      %p159 = por %p157, %p158
      %p161 = scmp.ne.s32.totalorder %s146, %s160
      %p162 = scmp.eq.s32.totalorder %s28, 0
      %p163 = por %p161, %p162
      %s165 = sadd.s32 %s164, 1
      %p168 = scmp.eq.s32.totalorder %s22, 1
      %p169 = scmp.ne.s32.totalorder %s164, %s166
      %p170 = scmp.eq.s32.totalorder %s22, 0
      %p171 = por %p169, %p170
      %p172 = scmp.ne.s32.totalorder %s164, %s166
      %p173 = scmp.eq.s32.totalorder %s27, 1
      %p174 = por %p172, %p173
      %p175 = scmp.ne.s32.totalorder %s166, %s167
      %p176 = scmp.eq.s32.totalorder %s27, 0
      %p177 = por %p175, %p176
      %p178 = scmp.ne.s32.totalorder %s166, %s167
      %p179 = scmp.eq.s32.totalorder %s28, 1
      %p180 = por %p178, %p179
      %p182 = scmp.ne.s32.totalorder %s167, %s181
      %p183 = scmp.eq.s32.totalorder %s28, 0
      %p184 = por %p182, %p183
      %s186 = sadd.s32 %s185, 1
      %p189 = scmp.eq.s32.totalorder %s22, 1
      %p190 = scmp.ne.s32.totalorder %s185, %s187
      %p191 = scmp.eq.s32.totalorder %s22, 0
      %p192 = por %p190, %p191
      %p193 = scmp.ne.s32.totalorder %s185, %s187
      %p194 = scmp.eq.s32.totalorder %s27, 1
      %p195 = por %p193, %p194
      %p196 = scmp.ne.s32.totalorder %s187, %s188
      %p197 = scmp.eq.s32.totalorder %s27, 0
      %p198 = por %p196, %p197
      %p199 = scmp.ne.s32.totalorder %s187, %s188
      %p200 = scmp.eq.s32.totalorder %s28, 1
      %p201 = por %p199, %p200
      %p203 = scmp.ne.s32.totalorder %s188, %s202
      %p204 = scmp.eq.s32.totalorder %s28, 0
      %p205 = por %p203, %p204
      %s207 = sadd.s32 %s206, 1
      %p210 = scmp.eq.s32.totalorder %s22, 1
      %p211 = scmp.ne.s32.totalorder %s206, %s208
      %p212 = scmp.eq.s32.totalorder %s22, 0
      %p213 = por %p211, %p212
      %p214 = scmp.ne.s32.totalorder %s206, %s208
      %p215 = scmp.eq.s32.totalorder %s27, 1
      %p216 = por %p214, %p215
      %p217 = scmp.ne.s32.totalorder %s208, %s209
      %p218 = scmp.eq.s32.totalorder %s27, 0
      %p219 = por %p217, %p218
      %p220 = scmp.ne.s32.totalorder %s208, %s209
      %p221 = scmp.eq.s32.totalorder %s28, 1
      %p222 = por %p220, %p221
      %p224 = scmp.ne.s32.totalorder %s209, %s223
      %p225 = scmp.eq.s32.totalorder %s28, 0
      %p226 = por %p224, %p225
      %s227 = ssub.s32 %s29, %s41
      %s228 = ssub.s32 %s30, %s37
      %s229 = sor.u32 %s227, %s228
      %p230 = scmp.eq.s32.totalorder %s229, 0
      %s232 = sadd.s32 %s231, 1
      %s233 = scalar_select %p230, %s231, %s232
      %p236 = pneg %p230
      %p237 = scmp.eq.s32.totalorder %s22, 1
      %p238 = por %p236, %p237
      %p239 = scmp.ne.s32.totalorder %s231, %s234
      %p240 = scmp.eq.s32.totalorder %s22, 0
      %p241 = por %p239, %p240
      %p242 = scmp.ne.s32.totalorder %s231, %s234
      %p243 = scmp.eq.s32.totalorder %s27, 1
      %p244 = por %p242, %p243
      %p245 = scmp.ne.s32.totalorder %s234, %s235
      %p246 = scmp.eq.s32.totalorder %s27, 0
      %p247 = por %p245, %p246
      %p248 = scmp.ne.s32.totalorder %s234, %s235
      %p249 = scmp.eq.s32.totalorder %s28, 1
      %p250 = por %p248, %p249
      %p252 = scmp.ne.s32.totalorder %s235, %s251
      %p253 = scmp.eq.s32.totalorder %s28, 0
      %p254 = por %p252, %p253
      %s255 = ssub.s32 %s29, %s41
      %s256 = ssub.s32 %s30, %s37
      %s257 = sor.u32 %s255, %s256
      %p258 = scmp.eq.s32.totalorder %s257, 0
      %s260 = sadd.s32 %s259, 1
      %s261 = scalar_select %p258, %s259, %s260
      %p264 = pneg %p258
      %p265 = scmp.eq.s32.totalorder %s22, 1
      %p266 = por %p264, %p265
      %p267 = scmp.ne.s32.totalorder %s259, %s262
      %p268 = scmp.eq.s32.totalorder %s22, 0
      %p269 = por %p267, %p268
      %p270 = scmp.ne.s32.totalorder %s259, %s262
      %p271 = scmp.eq.s32.totalorder %s27, 1
      %p272 = por %p270, %p271
      %p273 = scmp.ne.s32.totalorder %s262, %s263
      %p274 = scmp.eq.s32.totalorder %s27, 0
      %p275 = por %p273, %p274
      %p276 = scmp.ne.s32.totalorder %s262, %s263
      %p277 = scmp.eq.s32.totalorder %s28, 1
      %p278 = por %p276, %p277
      %p280 = scmp.ne.s32.totalorder %s263, %s279
      %p281 = scmp.eq.s32.totalorder %s28, 0
      %p282 = por %p280, %p281
      %p283 = scmp.le.s32.totalorder 1, %s22
      %p284 = scmp.lt.s32.totalorder %s22, 3
      %p285 = pnand %p283, %p284
      %p286 = pneg %p285
      // Predicated region
      $region9: #{tpu_custom_call.1} parent=5 // pred_check
        _
      $region10: #{tpu_custom_call.1} parent=5 // pred_check_branch
        %288 = sbr.rel (%p285) target = $region12
      $region11: #{tpu_custom_call.1} parent=5 // pred_region
        %s289 = ssub.s32 %s22, 1
        // Predicated region
        $region13: #{tpu_custom_call.1} parent=11 // pred_check
          %p290 = pneg %p88
        $region14: #{tpu_custom_call.1} parent=11 // pred_check_branch
          %292 = sbr.rel (%p290) target = $region16
        $region15: #{tpu_custom_call.1} parent=11 // pred_region
          %p293 = scmp.lt.s32.totalorder %s31, 1
          %s294 = scalar_select %p293, %s31, 1
          %s295 = smul.addr %s294, 4
          %s296 = smul.addr %s295, 8
          %s297 = scalar_lea.vmem %s1, %s296
        $region16: #{tpu_custom_call.1} parent=11 // pred_fallthru
          _
        // Predicated region
        $region17: #{tpu_custom_call.1} parent=11 // pred_check
          %p298 = pneg %p114
        $region18: #{tpu_custom_call.1} parent=11 // pred_check_branch
          %300 = sbr.rel (%p298) target = $region20
        $region19: #{tpu_custom_call.1} parent=11 // pred_region
          %p301 = scmp.lt.s32.totalorder %s31, 1
          %s302 = scalar_select %p301, %s31, 1
          %s303 = smul.addr %s302, 16
          %s304 = smul.addr %s303, 8
          %s305 = scalar_lea.vmem %s2, %s304
        $region20: #{tpu_custom_call.1} parent=11 // pred_fallthru
          _
        // Predicated region
        $region21: #{tpu_custom_call.1} parent=11 // pred_check
          %p306 = pneg %p135
        $region22: #{tpu_custom_call.1} parent=11 // pred_check_branch
          %308 = sbr.rel (%p306) target = $region24
        $region23: #{tpu_custom_call.1} parent=11 // pred_region
          _
        $region24: #{tpu_custom_call.1} parent=11 // pred_fallthru
          _
        // Predicated region
        $region25: #{tpu_custom_call.1} parent=11 // pred_check
          %p309 = pneg %p156
        $region26: #{tpu_custom_call.1} parent=11 // pred_check_branch
          %311 = sbr.rel (%p309) target = $region28
        $region27: #{tpu_custom_call.1} parent=11 // pred_region
          _
        $region28: #{tpu_custom_call.1} parent=11 // pred_fallthru
          _
        // Predicated region
        $region29: #{tpu_custom_call.1} parent=11 // pred_check
          %p312 = pneg %p177
        $region30: #{tpu_custom_call.1} parent=11 // pred_check_branch
          %314 = sbr.rel (%p312) target = $region32
        $region31: #{tpu_custom_call.1} parent=11 // pred_region
          _
        $region32: #{tpu_custom_call.1} parent=11 // pred_fallthru
          _
        // Predicated region
        $region33: #{tpu_custom_call.1} parent=11 // pred_check
          %p315 = pneg %p198
        $region34: #{tpu_custom_call.1} parent=11 // pred_check_branch
          %317 = sbr.rel (%p315) target = $region36
        $region35: #{tpu_custom_call.1} parent=11 // pred_region
          _
        $region36: #{tpu_custom_call.1} parent=11 // pred_fallthru
          _
        // Predicated region
        $region37: #{tpu_custom_call.1} parent=11 // pred_check
          %p318 = pneg %p219
        $region38: #{tpu_custom_call.1} parent=11 // pred_check_branch
          %320 = sbr.rel (%p318) target = $region40
        $region39: #{tpu_custom_call.1} parent=11 // pred_region
          _
        $region40: #{tpu_custom_call.1} parent=11 // pred_fallthru
          _
      $region12: #{tpu_custom_call.1} parent=5 // pred_fallthru
        _
      %p321 = scmp.lt.s32.totalorder %s22, 2
      // Predicated region
      $region41: #{tpu_custom_call.1} parent=5 // pred_check
        %p322 = pneg %p321
      $region42: #{tpu_custom_call.1} parent=5 // pred_check_branch
        %324 = sbr.rel (%p322) target = $region44
      $region43: #{tpu_custom_call.1} parent=5 // pred_region
        // Predicated region
        $region45: #{tpu_custom_call.1} parent=43 // pred_check
          %p325 = pneg %p56
        $region46: #{tpu_custom_call.1} parent=43 // pred_check_branch
          %327 = sbr.rel (%p325) target = $region48
        $region47: #{tpu_custom_call.1} parent=43 // pred_region
          %p328 = scmp.lt.s32.totalorder %s29, 1
          %s329 = scalar_select %p328, %s29, 1
          %p330 = scmp.lt.s32.totalorder %s30, 0
          %s331 = scalar_select %p330, %s30, 0
          %s332 = sadd.s32 %s331, %s329
          %s333 = smul.addr %s332, 8
          %s334 = scalar_lea.vmem %s0, %s333
        $region48: #{tpu_custom_call.1} parent=43 // pred_fallthru
          _
      $region44: #{tpu_custom_call.1} parent=5 // pred_fallthru
        _
      %p335 = scmp.le.s32.totalorder 1, %s22
      %p336 = scmp.lt.s32.totalorder %s22, 3
      %p337 = pnand %p335, %p336
      %p338 = pneg %p337
      // Predicated region
      $region49: #{tpu_custom_call.1} parent=5 // pred_check
        _
      $region50: #{tpu_custom_call.1} parent=5 // pred_check_branch
        %340 = sbr.rel (%p337) target = $region52
      $region51: #{tpu_custom_call.1} parent=5 // pred_region
        %s341 = ssub.s32 %s22, 1
        %p342 = scmp.lt.s32.totalorder %s31, 1
        %s343 = scalar_select %p342, %s31, 1
        %p344 = scmp.lt.s32.totalorder %s32, 0
        %s345 = scalar_select %p344, %s32, 0
        %s346 = sadd.s32 %s345, %s343
        %s347 = smul.addr %s346, 8
        %s348 = scalar_lea.vmem %s0, %s347
        %p349 = pneg %p62
        %p350 = pneg %p59
        %p351 = scmp.lt.s32.totalorder %s31, 1
        %s352 = scalar_select %p351, %s31, 1
        %s353 = smul.addr %s352, 4
        %s354 = smul.addr %s353, 8
        %s355 = scalar_lea.vmem %s1, %s354
        %p356 = pneg %p88
        %p357 = pneg %p85
        %p358 = scmp.lt.s32.totalorder %s31, 1
        %s359 = scalar_select %p358, %s31, 1
        %s360 = smul.addr %s359, 16
        %s361 = smul.addr %s360, 8
        %s362 = scalar_lea.vmem %s2, %s361
        %p363 = pneg %p114
        %p364 = pneg %p111
        %p365 = pneg %p135
        %p366 = pneg %p132
        %p367 = pneg %p156
        %p368 = pneg %p153
        %p369 = pneg %p177
        %p370 = pneg %p174
        %p371 = pneg %p198
        %p372 = pneg %p195
        %p373 = pneg %p219
        %p374 = pneg %p216
        %p375 = pneg %p247
        %p376 = pneg %p244
        %s377 = sand.u32 %s234, 1
        %s378 = scalar_lea.sflag [#allocation6], %s377
        %s379 = sand.u32 %s234, 1
        %s380 = smul.addr %s379, 8
        %s381 = scalar_lea.vmem [#allocation5], %s380
        %p382 = pneg %p275
        %p383 = pneg %p272
        %s384 = sand.u32 %s262, 1
        %s385 = scalar_lea.sflag [#allocation8], %s384
        %s386 = sand.u32 %s262, 1
        %s387 = smul.addr %s386, 8
        %s388 = scalar_lea.vmem [#allocation7], %s387
        %p389 = scmp.lt.s32.totalorder %s31, 1
        %s390 = scalar_select %p389, %s31, 1
        %p391 = scmp.lt.s32.totalorder %s32, 0
        %s392 = scalar_select %p391, %s32, 0
        %s393 = sadd.s32 %s392, %s390
        %s394 = smul.addr %s393, 8
        %s395 = scalar_lea.vmem %s0, %s394
        %p396 = scmp.lt.s32.totalorder %s31, 1
        %s397 = scalar_select %p396, %s31, 1
        %s398 = smul.addr %s397, 4
        %s399 = smul.addr %s398, 8
        %s400 = scalar_lea.vmem %s1, %s399
        %p401 = scmp.lt.s32.totalorder %s31, 1
        %s402 = scalar_select %p401, %s31, 1
        %s403 = smul.addr %s402, 16
        %s404 = smul.addr %s403, 8
        %s405 = scalar_lea.vmem %s2, %s404
        %p406 = scmp.eq.s32.totalorder %s32, 0
        // Predicated region
        $region53: #{tpu_custom_call.1} parent=51 // pred_check
          %p407 = pneg %p406
        $region54: #{tpu_custom_call.1} parent=51 // pred_check_branch
          %409 = sbr.rel (%p407) target = $region56
        $region55: #{tpu_custom_call.1} parent=51 // pred_region
          %v410 = vld [vmem:[%s5] sm:$0xff]
          %v411 = vld [vmem:[%s5 + $0x8] sm:$0xff]
          %v412 = vld [vmem:[%s5 + $0x10] sm:$0xff]
          %v413 = vld [vmem:[%s5 + $0x18] sm:$0xff]
          %v414 = vld [vmem:[%s400] sm:$0xff]
          %v415 = vld [vmem:[%s400 + $0x8] sm:$0xff]
          %v416 = vld [vmem:[%s400 + $0x10] sm:$0xff]
          %v417 = vld [vmem:[%s400 + $0x18] sm:$0xff]
          %v418 = vld [vmem:[%s6] sm:$0xff]
          %v419 = vld [vmem:[%s6 + $0x8] sm:$0xff]
          %v420 = vld [vmem:[%s6 + $0x10] sm:$0xff]
          %v421 = vld [vmem:[%s6 + $0x18] sm:$0xff]
          %423 = vset.pattern.permute.xlu0 0
          %424 = vperm.xlu0 %423, %v418
          %v425 = vpop.permute.xlu0 %424
          %428 = vset.pattern.permute.xlu0 0
          %429 = vperm.xlu0 %428, %v419
          %v430 = vpop.permute.xlu0 %429
          %433 = vset.pattern.permute.xlu0 0
          %434 = vperm.xlu0 %433, %v420
          %v435 = vpop.permute.xlu0 %434
          %438 = vset.pattern.permute.xlu0 0
          %439 = vperm.xlu0 %438, %v421
          %v440 = vpop.permute.xlu0 %439
          %vm442 = vcmask 261120
          %v444 = vsel %vm442, %v410, 0
          %v447 = vsel %vm442, %v411, 0
          %v450 = vsel %vm442, %v412, 0
          %v453 = vsel %vm442, %v413, 0
          %455 = vmatprep.subr.mxu0 0.0
          %456 = vmatpush1.msra.mxu0 %v414
          %457 = vmatprep.subr.mxu0 0.0
          %458 = vmatpush1.msra.mxu0 %v415
          %459 = vmatprep.subr.mxu0 0.0
          %460 = vmatpush1.msra.mxu0 %v416
          %461 = vmatprep.subr.mxu0 0.0
          %462 = vmatpush1.msra.mxu0 %v417
          %463 = vmatprep.subr.mxu0 0.0
          %464 = vmatpush1.msra.mxu0 0.0
          %465 = vmatprep.subr.mxu0 0.0
          %466 = vmatpush1.msra.mxu0 0.0
          %467 = vmatprep.subr.mxu0 0.0
          %468 = vmatpush1.msra.mxu0 0.0
          %469 = vmatprep.subr.mxu0 0.0
          %470 = vmatpush1.msra.mxu0 0.0
          %471 = vmatprep.subr.mxu0 0.0
          %472 = vmatpush1.msra.mxu0 0.0
          %473 = vmatprep.subr.mxu0 0.0
          %474 = vmatpush1.msra.mxu0 0.0
          %475 = vmatprep.subr.mxu0 0.0
          %476 = vmatpush1.msra.mxu0 0.0
          %477 = vmatprep.subr.mxu0 0.0
          %478 = vmatpush1.msra.mxu0 0.0
          %479 = vmatprep.subr.mxu0 0.0
          %480 = vmatpush1.msra.mxu0 0.0
          %481 = vmatprep.subr.mxu0 0.0
          %482 = vmatpush1.msra.mxu0 0.0
          %483 = vmatprep.subr.mxu0 0.0
          %484 = vmatpush1.msra.mxu0 0.0
          %485 = vmatprep.subr.mxu0 0.0
          %486 = vmatpush1.msra.mxu0 0.0
          %487 = vmatprep.subr.mxu0 0.0
          %488 = vmatpush1.msra.mxu0 0.0
          %489 = vmatprep.subr.mxu0 0.0
          %490 = vmatpush1.msra.mxu0 0.0
          %491 = vmatprep.subr.mxu0 0.0
          %492 = vmatpush1.msra.mxu0 0.0
          %493 = vmatprep.subr.mxu0 0.0
          %494 = vmatpush1.msra.mxu0 0.0
          %495 = vmatprep.subr.mxu0 0.0
          %496 = vmatpush1.msra.mxu0 0.0
          %497 = vmatprep.subr.mxu0 0.0
          %498 = vmatpush1.msra.mxu0 0.0
          %499 = vmatprep.subr.mxu0 0.0
          %500 = vmatpush1.msra.mxu0 0.0
          %501 = vmatprep.subr.mxu0 0.0
          %502 = vmatpush1.msra.mxu0 0.0
          %503 = vmatprep.subr.mxu0 0.0
          %504 = vmatpush1.msra.mxu0 0.0
          %505 = vmatprep.subr.mxu0 0.0
          %506 = vmatpush1.msra.mxu0 0.0
          %507 = vmatprep.subr.mxu0 0.0
          %508 = vmatpush1.msra.mxu0 0.0
          %509 = vmatprep.subr.mxu0 0.0
          %510 = vmatpush1.msra.mxu0 0.0
          %511 = vmatprep.subr.mxu0 0.0
          %512 = vmatpush1.msra.mxu0 0.0
          %513 = vmatprep.subr.mxu0 0.0
          %514 = vmatpush1.msra.mxu0 0.0
          %515 = vmatprep.subr.mxu0 0.0
          %516 = vmatpush1.msra.mxu0 0.0
          %517 = vmatprep.subr.mxu0 0.0
          %518 = vmatpush1.msra.mxu0 0.0
          %519 = vmatprep.mubr.f32.mxu0 0.0
          %520 = vmatmul.mubr.f32.gmra.mrb[0].mxu0 %v444
          %v521 = vpop.f32.mrb[0].mxu0
          %v522 = vadd.f32 %v425, %v521
          %v523 = vpop.f32.mrb[0].mxu0
          %524 = vmatprep.mubr.f32.mxu0 0.0
          %525 = vmatmul.mubr.f32.gmra.mrb[0].mxu0 %v447
          %v526 = vpop.f32.mrb[0].mxu0
          %v527 = vadd.f32 %v430, %v526
          %v528 = vpop.f32.mrb[0].mxu0
          %529 = vmatprep.mubr.f32.mxu0 0.0
          %530 = vmatmul.mubr.f32.gmra.mrb[0].mxu0 %v450
          %v531 = vpop.f32.mrb[0].mxu0
          %v532 = vadd.f32 %v435, %v531
          %v533 = vpop.f32.mrb[0].mxu0
          %534 = vmatprep.mubr.f32.mxu0 0.0
          %535 = vmatmul.mubr.f32.gmra.mrb[0].mxu0 %v453
          %v536 = vpop.f32.mrb[0].mxu0
          %v537 = vadd.f32 %v440, %v536
          %v538 = vpop.f32.mrb[0].mxu0
          %539 = vdwg.mxu0
          %540 = vst [vmem:[#allocation3] sm:$0xff] %v522
          %541 = vst [vmem:[#allocation3 + $0x8] sm:$0xff] %v527
          %542 = vst [vmem:[#allocation3 + $0x10] sm:$0xff] %v532
          %543 = vst [vmem:[#allocation3 + $0x18] sm:$0xff] %v537
        $region56: #{tpu_custom_call.1} parent=51 // pred_fallthru
          _
        %v544 = vld [vmem:[%s395] sm:$0xff]
        %v545 = vld [vmem:[%s3] sm:$0xff]
        %v546 = vld [vmem:[%s3 + $0x8] sm:$0xff]
        %v547 = vld [vmem:[%s3 + $0x10] sm:$0xff]
        %v548 = vld [vmem:[%s3 + $0x18] sm:$0xff]
        %v549 = vld [vmem:[%s4] sm:$0x1]
        %v551 = vlaneseq
        %v552 = vshrl.u32 %v551, 7
        %v553 = vsub.s32 0, %v552
        %v554 = vrot.slane %v549, %v553
        %vm556 = vcmask 261120
        %v558 = vsel %vm556, %v544, 0
        %560 = vmatprep.subr.mxu0 0.0
        %561 = vmatpush1.msra.mxu0 %v545
        %562 = vmatprep.subr.mxu0 0.0
        %563 = vmatpush1.msra.mxu0 %v546
        %564 = vmatprep.subr.mxu0 0.0
        %565 = vmatpush1.msra.mxu0 %v547
        %566 = vmatprep.subr.mxu0 0.0
        %567 = vmatpush1.msra.mxu0 %v548
        %568 = vmatprep.subr.mxu0 0.0
        %569 = vmatpush1.msra.mxu0 0.0
        %570 = vmatprep.subr.mxu0 0.0
        %571 = vmatpush1.msra.mxu0 0.0
        %572 = vmatprep.subr.mxu0 0.0
        %573 = vmatpush1.msra.mxu0 0.0
        %574 = vmatprep.subr.mxu0 0.0
        %575 = vmatpush1.msra.mxu0 0.0
        %576 = vmatprep.subr.mxu0 0.0
        %577 = vmatpush1.msra.mxu0 0.0
        %578 = vmatprep.subr.mxu0 0.0
        %579 = vmatpush1.msra.mxu0 0.0
        %580 = vmatprep.subr.mxu0 0.0
        %581 = vmatpush1.msra.mxu0 0.0
        %582 = vmatprep.subr.mxu0 0.0
        %583 = vmatpush1.msra.mxu0 0.0
        %584 = vmatprep.subr.mxu0 0.0
        %585 = vmatpush1.msra.mxu0 0.0
        %586 = vmatprep.subr.mxu0 0.0
        %587 = vmatpush1.msra.mxu0 0.0
        %588 = vmatprep.subr.mxu0 0.0
        %589 = vmatpush1.msra.mxu0 0.0
        %590 = vmatprep.subr.mxu0 0.0
        %591 = vmatpush1.msra.mxu0 0.0
        %592 = vmatprep.subr.mxu0 0.0
        %593 = vmatpush1.msra.mxu0 0.0
        %594 = vmatprep.subr.mxu0 0.0
        %595 = vmatpush1.msra.mxu0 0.0
        %596 = vmatprep.subr.mxu0 0.0
        %597 = vmatpush1.msra.mxu0 0.0
        %598 = vmatprep.subr.mxu0 0.0
        %599 = vmatpush1.msra.mxu0 0.0
        %600 = vmatprep.subr.mxu0 0.0
        %601 = vmatpush1.msra.mxu0 0.0
        %602 = vmatprep.subr.mxu0 0.0
        %603 = vmatpush1.msra.mxu0 0.0
        %604 = vmatprep.subr.mxu0 0.0
        %605 = vmatpush1.msra.mxu0 0.0
        %606 = vmatprep.subr.mxu0 0.0
        %607 = vmatpush1.msra.mxu0 0.0
        %608 = vmatprep.subr.mxu0 0.0
        %609 = vmatpush1.msra.mxu0 0.0
        %610 = vmatprep.subr.mxu0 0.0
        %611 = vmatpush1.msra.mxu0 0.0
        %612 = vmatprep.subr.mxu0 0.0
        %613 = vmatpush1.msra.mxu0 0.0
        %614 = vmatprep.subr.mxu0 0.0
        %615 = vmatpush1.msra.mxu0 0.0
        %616 = vmatprep.subr.mxu0 0.0
        %617 = vmatpush1.msra.mxu0 0.0
        %618 = vmatprep.subr.mxu0 0.0
        %619 = vmatpush1.msra.mxu0 0.0
        %620 = vmatprep.subr.mxu0 0.0
        %621 = vmatpush1.msra.mxu0 0.0
        %622 = vmatprep.subr.mxu0 0.0
        %623 = vmatpush1.msra.mxu0 0.0
        %624 = vmatprep.mubr.f32.mxu0 0.0
        %625 = vmatmul.mubr.f32.gmra.mrb[0].mxu0 %v558
        %v626 = vpop.f32.mrb[0].mxu0
        %v627 = vadd.f32 %v554, %v626
        %v628 = vpop.f32.mrb[0].mxu0
        %629 = vdwg.mxu0
        %630 = vst.msk [vmem:[#allocation2] sm:$0xff] %vm556, %v627
        %v631 = vld [vmem:[%s7] sm:$0xff]
        %v632 = vld [vmem:[%s7 + $0x8] sm:$0xff]
        %v633 = vld [vmem:[%s7 + $0x10] sm:$0xff]
        %v634 = vld [vmem:[%s7 + $0x18] sm:$0xff]
        %v635 = vld [vmem:[#allocation2] sm:$0xff]
        %v636 = vlaneseq
        %v637 = vshrl.u32 %v636, 7
        %v638 = vsub.s32 0, %v637
        %v639 = vrot.slane %v635, %v638
        %641 = vbcast.lane.b32.xlu0 %v639, 256
        %v642 = vpop.permute.xlu0 %641
        %s644 = sor.u32 256, 8
        %645 = vbcast.lane.b32.xlu0 %v639, %s644
        %v646 = vpop.permute.xlu0 %645
        %s648 = sor.u32 256, 16
        %649 = vbcast.lane.b32.xlu0 %v639, %s648
        %v650 = vpop.permute.xlu0 %649
        %s652 = sor.u32 256, 24
        %653 = vbcast.lane.b32.xlu0 %v639, %s652
        %v654 = vpop.permute.xlu0 %653
        %v655 = vlaneseq
        %v656 = vshrl.u32 %v655, 7
        %v657 = vsub.s32 1, %v656
        %v658 = vrot.slane %v635, %v657
        %660 = vbcast.lane.b32.xlu0 %v658, 256
        %v661 = vpop.permute.xlu0 %660
        %s663 = sor.u32 256, 8
        %664 = vbcast.lane.b32.xlu0 %v658, %s663
        %v665 = vpop.permute.xlu0 %664
        %s667 = sor.u32 256, 16
        %668 = vbcast.lane.b32.xlu0 %v658, %s667
        %v669 = vpop.permute.xlu0 %668
        %s671 = sor.u32 256, 24
        %672 = vbcast.lane.b32.xlu0 %v658, %s671
        %v673 = vpop.permute.xlu0 %672
        %v674 = vlaneseq
        %v675 = vshrl.u32 %v674, 7
        %v676 = vsub.s32 2, %v675
        %v677 = vrot.slane %v635, %v676
        %679 = vbcast.lane.b32.xlu0 %v677, 256
        %v680 = vpop.permute.xlu0 %679
        %s682 = sor.u32 256, 8
        %683 = vbcast.lane.b32.xlu0 %v677, %s682
        %v684 = vpop.permute.xlu0 %683
        %s686 = sor.u32 256, 16
        %687 = vbcast.lane.b32.xlu0 %v677, %s686
        %v688 = vpop.permute.xlu0 %687
        %s690 = sor.u32 256, 24
        %691 = vbcast.lane.b32.xlu0 %v677, %s690
        %v692 = vpop.permute.xlu0 %691
        %v693 = vlaneseq
        %v694 = vshrl.u32 %v693, 7
        %v695 = vsub.s32 3, %v694
        %v696 = vrot.slane %v635, %v695
        %698 = vbcast.lane.b32.xlu0 %v696, 256
        %v699 = vpop.permute.xlu0 %698
        %s701 = sor.u32 256, 8
        %702 = vbcast.lane.b32.xlu0 %v696, %s701
        %v703 = vpop.permute.xlu0 %702
        %s705 = sor.u32 256, 16
        %706 = vbcast.lane.b32.xlu0 %v696, %s705
        %v707 = vpop.permute.xlu0 %706
        %s709 = sor.u32 256, 24
        %710 = vbcast.lane.b32.xlu0 %v696, %s709
        %v711 = vpop.permute.xlu0 %710
        %v712 = vlaneseq
        %v713 = vshrl.u32 %v712, 7
        %v714 = vsub.s32 4, %v713
        %v715 = vrot.slane %v635, %v714
        %717 = vbcast.lane.b32.xlu0 %v715, 256
        %v718 = vpop.permute.xlu0 %717
        %s720 = sor.u32 256, 8
        %721 = vbcast.lane.b32.xlu0 %v715, %s720
        %v722 = vpop.permute.xlu0 %721
        %s724 = sor.u32 256, 16
        %725 = vbcast.lane.b32.xlu0 %v715, %s724
        %v726 = vpop.permute.xlu0 %725
        %s728 = sor.u32 256, 24
        %729 = vbcast.lane.b32.xlu0 %v715, %s728
        %v730 = vpop.permute.xlu0 %729
        %v731 = vlaneseq
        %v732 = vshrl.u32 %v731, 7
        %v733 = vsub.s32 5, %v732
        %v734 = vrot.slane %v635, %v733
        %736 = vbcast.lane.b32.xlu0 %v734, 256
        %v737 = vpop.permute.xlu0 %736
        %s739 = sor.u32 256, 8
        %740 = vbcast.lane.b32.xlu0 %v734, %s739
        %v741 = vpop.permute.xlu0 %740
        %s743 = sor.u32 256, 16
        %744 = vbcast.lane.b32.xlu0 %v734, %s743
        %v745 = vpop.permute.xlu0 %744
        %s747 = sor.u32 256, 24
        %748 = vbcast.lane.b32.xlu0 %v734, %s747
        %v749 = vpop.permute.xlu0 %748
        %v750 = vlaneseq
        %v751 = vshrl.u32 %v750, 7
        %v752 = vsub.s32 6, %v751
        %v753 = vrot.slane %v635, %v752
        %755 = vbcast.lane.b32.xlu0 %v753, 256
        %v756 = vpop.permute.xlu0 %755
        %s758 = sor.u32 256, 8
        %759 = vbcast.lane.b32.xlu0 %v753, %s758
        %v760 = vpop.permute.xlu0 %759
        %s762 = sor.u32 256, 16
        %763 = vbcast.lane.b32.xlu0 %v753, %s762
        %v764 = vpop.permute.xlu0 %763
        %s766 = sor.u32 256, 24
        %767 = vbcast.lane.b32.xlu0 %v753, %s766
        %v768 = vpop.permute.xlu0 %767
        %v769 = vlaneseq
        %v770 = vshrl.u32 %v769, 7
        %v771 = vsub.s32 7, %v770
        %v772 = vrot.slane %v635, %v771
        %774 = vbcast.lane.b32.xlu0 %v772, 256
        %v775 = vpop.permute.xlu0 %774
        %s777 = sor.u32 256, 8
        %778 = vbcast.lane.b32.xlu0 %v772, %s777
        %v779 = vpop.permute.xlu0 %778
        %s781 = sor.u32 256, 16
        %782 = vbcast.lane.b32.xlu0 %v772, %s781
        %v783 = vpop.permute.xlu0 %782
        %s785 = sor.u32 256, 24
        %786 = vbcast.lane.b32.xlu0 %v772, %s785
        %v787 = vpop.permute.xlu0 %786
        %v788 = vld [vmem:[#allocation3] sm:$0xff]
        %v789 = vld [vmem:[#allocation3 + $0x8] sm:$0xff]
        %v790 = vld [vmem:[#allocation3 + $0x10] sm:$0xff]
        %v791 = vld [vmem:[#allocation3 + $0x18] sm:$0xff]
        %v792 = vadd.f32 %v642, %v788
        %v793 = vadd.f32 %v646, %v789
        %v794 = vadd.f32 %v650, %v790
        %v795 = vadd.f32 %v654, %v791
        %v796 = vadd.f32 %v661, %v788
        %v797 = vadd.f32 %v665, %v789
        %v798 = vadd.f32 %v669, %v790
        %v799 = vadd.f32 %v673, %v791
        %v800 = vadd.f32 %v680, %v788
        %v801 = vadd.f32 %v684, %v789
        %v802 = vadd.f32 %v688, %v790
        %v803 = vadd.f32 %v692, %v791
        %v804 = vadd.f32 %v699, %v788
        %v805 = vadd.f32 %v703, %v789
        %v806 = vadd.f32 %v707, %v790
        %v807 = vadd.f32 %v711, %v791
        %v808 = vadd.f32 %v718, %v788
        %v809 = vadd.f32 %v722, %v789
        %v810 = vadd.f32 %v726, %v790
        %v811 = vadd.f32 %v730, %v791
        %v812 = vadd.f32 %v737, %v788
        %v813 = vadd.f32 %v741, %v789
        %v814 = vadd.f32 %v745, %v790
        %v815 = vadd.f32 %v749, %v791
        %v816 = vadd.f32 %v756, %v788
        %v817 = vadd.f32 %v760, %v789
        %v818 = vadd.f32 %v764, %v790
        %v819 = vadd.f32 %v768, %v791
        %v820 = vadd.f32 %v775, %v788
        %v821 = vadd.f32 %v779, %v789
        %v822 = vadd.f32 %v783, %v790
        %v823 = vadd.f32 %v787, %v791
        %v824 = vtanh.pop %v792
        %v825 = vtanh.pop %v793
        %v826 = vtanh.pop %v794
        %v827 = vtanh.pop %v795
        %v828 = vtanh.pop %v796
        %v829 = vtanh.pop %v797
        %v830 = vtanh.pop %v798
        %v831 = vtanh.pop %v799
        %v832 = vtanh.pop %v800
        %v833 = vtanh.pop %v801
        %v834 = vtanh.pop %v802
        %v835 = vtanh.pop %v803
        %v836 = vtanh.pop %v804
        %v837 = vtanh.pop %v805
        %v838 = vtanh.pop %v806
        %v839 = vtanh.pop %v807
        %v840 = vtanh.pop %v808
        %v841 = vtanh.pop %v809
        %v842 = vtanh.pop %v810
        %v843 = vtanh.pop %v811
        %v844 = vtanh.pop %v812
        %v845 = vtanh.pop %v813
        %v846 = vtanh.pop %v814
        %v847 = vtanh.pop %v815
        %v848 = vtanh.pop %v816
        %v849 = vtanh.pop %v817
        %v850 = vtanh.pop %v818
        %v851 = vtanh.pop %v819
        %v852 = vtanh.pop %v820
        %v853 = vtanh.pop %v821
        %v854 = vtanh.pop %v822
        %v855 = vtanh.pop %v823
        %857 = vset.pattern.permute.xlu0 0
        %858 = vperm.xlu0 %857, %v631
        %v859 = vpop.permute.xlu0 %858
        %862 = vset.pattern.permute.xlu0 0
        %863 = vperm.xlu0 %862, %v632
        %v864 = vpop.permute.xlu0 %863
        %867 = vset.pattern.permute.xlu0 0
        %868 = vperm.xlu0 %867, %v633
        %v869 = vpop.permute.xlu0 %868
        %872 = vset.pattern.permute.xlu0 0
        %873 = vperm.xlu0 %872, %v634
        %v874 = vpop.permute.xlu0 %873
        %v876 = vmul.f32 %v824, %v859
        %v877 = vmul.f32 %v825, %v864
        %v878 = vmul.f32 %v826, %v869
        %v879 = vmul.f32 %v827, %v874
        %v880 = vmul.f32 %v828, %v859
        %v881 = vmul.f32 %v829, %v864
        %v882 = vmul.f32 %v830, %v869
        %v883 = vmul.f32 %v831, %v874
        %v884 = vmul.f32 %v832, %v859
        %v885 = vmul.f32 %v833, %v864
        %v886 = vmul.f32 %v834, %v869
        %v887 = vmul.f32 %v835, %v874
        %v888 = vmul.f32 %v836, %v859
        %v889 = vmul.f32 %v837, %v864
        %v890 = vmul.f32 %v838, %v869
        %v891 = vmul.f32 %v839, %v874
        %v892 = vmul.f32 %v840, %v859
        %v893 = vmul.f32 %v841, %v864
        %v894 = vmul.f32 %v842, %v869
        %v895 = vmul.f32 %v843, %v874
        %v896 = vmul.f32 %v844, %v859
        %v897 = vmul.f32 %v845, %v864
        %v898 = vmul.f32 %v846, %v869
        %v899 = vmul.f32 %v847, %v874
        %v900 = vmul.f32 %v848, %v859
        %v901 = vmul.f32 %v849, %v864
        %v902 = vmul.f32 %v850, %v869
        %v903 = vmul.f32 %v851, %v874
        %v904 = vmul.f32 %v852, %v859
        %v905 = vmul.f32 %v853, %v864
        %v906 = vmul.f32 %v854, %v869
        %v907 = vmul.f32 %v855, %v874
        %v908 = vadd.f32 %v876, %v877
        %v909 = vadd.f32 %v908, %v878
        %v910 = vadd.f32 %v909, %v879
        %v911 = vrot.slane %v910, 4
        %v912 = vadd.f32 %v910, %v911
        %v913 = vrot.slane %v912, 2
        %v914 = vadd.f32 %v912, %v913
        %v915 = vrot.slane %v914, 1
        %v916 = vadd.f32 %v914, %v915
        %v917 = vadd.f32 %v880, %v881
        %v918 = vadd.f32 %v917, %v882
        %v919 = vadd.f32 %v918, %v883
        %v920 = vrot.slane %v919, 4
        %v921 = vadd.f32 %v919, %v920
        %v922 = vrot.slane %v921, 2
        %v923 = vadd.f32 %v921, %v922
        %v924 = vrot.slane %v923, 1
        %v925 = vadd.f32 %v923, %v924
        %v926 = vadd.f32 %v884, %v885
        %v927 = vadd.f32 %v926, %v886
        %v928 = vadd.f32 %v927, %v887
        %v929 = vrot.slane %v928, 4
        %v930 = vadd.f32 %v928, %v929
        %v931 = vrot.slane %v930, 2
        %v932 = vadd.f32 %v930, %v931
        %v933 = vrot.slane %v932, 1
        %v934 = vadd.f32 %v932, %v933
        %v935 = vadd.f32 %v888, %v889
        %v936 = vadd.f32 %v935, %v890
        %v937 = vadd.f32 %v936, %v891
        %v938 = vrot.slane %v937, 4
        %v939 = vadd.f32 %v937, %v938
        %v940 = vrot.slane %v939, 2
        %v941 = vadd.f32 %v939, %v940
        %v942 = vrot.slane %v941, 1
        %v943 = vadd.f32 %v941, %v942
        %v944 = vadd.f32 %v892, %v893
        %v945 = vadd.f32 %v944, %v894
        %v946 = vadd.f32 %v945, %v895
        %v947 = vrot.slane %v946, 4
        %v948 = vadd.f32 %v946, %v947
        %v949 = vrot.slane %v948, 2
        %v950 = vadd.f32 %v948, %v949
        %v951 = vrot.slane %v950, 1
        %v952 = vadd.f32 %v950, %v951
        %v953 = vadd.f32 %v896, %v897
        %v954 = vadd.f32 %v953, %v898
        %v955 = vadd.f32 %v954, %v899
        %v956 = vrot.slane %v955, 4
        %v957 = vadd.f32 %v955, %v956
        %v958 = vrot.slane %v957, 2
        %v959 = vadd.f32 %v957, %v958
        %v960 = vrot.slane %v959, 1
        %v961 = vadd.f32 %v959, %v960
        %v962 = vadd.f32 %v900, %v901
        %v963 = vadd.f32 %v962, %v902
        %v964 = vadd.f32 %v963, %v903
        %v965 = vrot.slane %v964, 4
        %v966 = vadd.f32 %v964, %v965
        %v967 = vrot.slane %v966, 2
        %v968 = vadd.f32 %v966, %v967
        %v969 = vrot.slane %v968, 1
        %v970 = vadd.f32 %v968, %v969
        %v971 = vadd.f32 %v904, %v905
        %v972 = vadd.f32 %v971, %v906
        %v973 = vadd.f32 %v972, %v907
        %v974 = vrot.slane %v973, 4
        %v975 = vadd.f32 %v973, %v974
        %v976 = vrot.slane %v975, 2
        %v977 = vadd.f32 %v975, %v976
        %v978 = vrot.slane %v977, 1
        %v979 = vadd.f32 %v977, %v978
        %vm988 = vcmask 1041409
        %v989 = vsel %vm988, %v925, %v916
        %vm990 = vcmask 1042434
        %v991 = vsel %vm990, %v934, %v989
        %vm992 = vcmask 1043459
        %v993 = vsel %vm992, %v943, %v991
        %vm994 = vcmask 1044484
        %v995 = vsel %vm994, %v952, %v993
        %vm996 = vcmask 1045509
        %v997 = vsel %vm996, %v961, %v995
        %vm998 = vcmask 1046534
        %v999 = vsel %vm998, %v970, %v997
        %vm1000 = vcmask 1047559
        %v1001 = vsel %vm1000, %v979, %v999
        %s1003 = sadd.s32 0, 0
        %s1004 = scalar_lea.vmem [#allocation4], %s1003
        %1005 = vst [vmem:[%s1004] sm:$0xff] %v1001
        %v1006 = vld [vmem:[#allocation4] sm:$0xff]
        %v1007 = vlaneseq
        %v1008 = vand.u32 %v1007, 127
        %vm1009 = vcmp.lt.s32.totalorder %v1008, 16
        %v1010 = vsel %vm1009, %v1006, -1e+30
        %1011 = vmax.xlane.f32.xlu0 %v1010
        %v1012 = vpop.xlane.xlu0 %1011
        %v1013 = vsub.f32 %v1010, %v1012
        %v1014 = vmul.f32 %v1013, 1.442695
        %v1015 = vpow.pop %v1014
        %1016 = vadd.xlane.f32.xlu0 %v1015
        %v1017 = vpop.xlane.xlu0 %1016
        %v1018 = vrcp.pop %v1017
        %v1019 = vmul.f32 %v1015, %v1018
        %1020 = vst [vmem:[%s388] sm:$0xff] %v1019
        %v1021 = vld [vmem:[%s405] sm:$0xff]
        %v1022 = vld [vmem:[%s405 + $0x8] sm:$0xff]
        %v1023 = vld [vmem:[%s405 + $0x10] sm:$0xff]
        %v1024 = vld [vmem:[%s405 + $0x18] sm:$0xff]
        %v1025 = vld [vmem:[%s405 + $0x20] sm:$0xff]
        %v1026 = vld [vmem:[%s405 + $0x28] sm:$0xff]
        %v1027 = vld [vmem:[%s405 + $0x30] sm:$0xff]
        %v1028 = vld [vmem:[%s405 + $0x38] sm:$0xff]
        %v1029 = vld [vmem:[%s405 + $0x40] sm:$0xff]
        %v1030 = vld [vmem:[%s405 + $0x48] sm:$0xff]
        %v1031 = vld [vmem:[%s405 + $0x50] sm:$0xff]
        %v1032 = vld [vmem:[%s405 + $0x58] sm:$0xff]
        %v1033 = vld [vmem:[%s405 + $0x60] sm:$0xff]
        %v1034 = vld [vmem:[%s405 + $0x68] sm:$0xff]
        %v1035 = vld [vmem:[%s405 + $0x70] sm:$0xff]
        %v1036 = vld [vmem:[%s405 + $0x78] sm:$0xff]
        %1037 = vmatprep.subr.mxu0 0.0
        %1038 = vmatpush1.msra.mxu0 %v1021
        %1039 = vmatprep.subr.mxu0 0.0
        %1040 = vmatpush1.msra.mxu0 %v1022
        %1041 = vmatprep.subr.mxu0 0.0
        %1042 = vmatpush1.msra.mxu0 %v1023
        %1043 = vmatprep.subr.mxu0 0.0
        %1044 = vmatpush1.msra.mxu0 %v1024
        %1045 = vmatprep.subr.mxu0 0.0
        %1046 = vmatpush1.msra.mxu0 %v1025
        %1047 = vmatprep.subr.mxu0 0.0
        %1048 = vmatpush1.msra.mxu0 %v1026
        %1049 = vmatprep.subr.mxu0 0.0
        %1050 = vmatpush1.msra.mxu0 %v1027
        %1051 = vmatprep.subr.mxu0 0.0
        %1052 = vmatpush1.msra.mxu0 %v1028
        %1053 = vmatprep.subr.mxu0 0.0
        %1054 = vmatpush1.msra.mxu0 %v1029
        %1055 = vmatprep.subr.mxu0 0.0
        %1056 = vmatpush1.msra.mxu0 %v1030
        %1057 = vmatprep.subr.mxu0 0.0
        %1058 = vmatpush1.msra.mxu0 %v1031
        %1059 = vmatprep.subr.mxu0 0.0
        %1060 = vmatpush1.msra.mxu0 %v1032
        %1061 = vmatprep.subr.mxu0 0.0
        %1062 = vmatpush1.msra.mxu0 %v1033
        %1063 = vmatprep.subr.mxu0 0.0
        %1064 = vmatpush1.msra.mxu0 %v1034
        %1065 = vmatprep.subr.mxu0 0.0
        %1066 = vmatpush1.msra.mxu0 %v1035
        %1067 = vmatprep.subr.mxu0 0.0
        %1068 = vmatpush1.msra.mxu0 %v1036
        %1069 = vmatprep.subr.mxu0 0.0
        %1070 = vmatpush1.msra.mxu0 0.0
        %1071 = vmatprep.subr.mxu0 0.0
        %1072 = vmatpush1.msra.mxu0 0.0
        %1073 = vmatprep.subr.mxu0 0.0
        %1074 = vmatpush1.msra.mxu0 0.0
        %1075 = vmatprep.subr.mxu0 0.0
        %1076 = vmatpush1.msra.mxu0 0.0
        %1077 = vmatprep.subr.mxu0 0.0
        %1078 = vmatpush1.msra.mxu0 0.0
        %1079 = vmatprep.subr.mxu0 0.0
        %1080 = vmatpush1.msra.mxu0 0.0
        %1081 = vmatprep.subr.mxu0 0.0
        %1082 = vmatpush1.msra.mxu0 0.0
        %1083 = vmatprep.subr.mxu0 0.0
        %1084 = vmatpush1.msra.mxu0 0.0
        %1085 = vmatprep.subr.mxu0 0.0
        %1086 = vmatpush1.msra.mxu0 0.0
        %1087 = vmatprep.subr.mxu0 0.0
        %1088 = vmatpush1.msra.mxu0 0.0
        %1089 = vmatprep.subr.mxu0 0.0
        %1090 = vmatpush1.msra.mxu0 0.0
        %1091 = vmatprep.subr.mxu0 0.0
        %1092 = vmatpush1.msra.mxu0 0.0
        %1093 = vmatprep.subr.mxu0 0.0
        %1094 = vmatpush1.msra.mxu0 0.0
        %1095 = vmatprep.subr.mxu0 0.0
        %1096 = vmatpush1.msra.mxu0 0.0
        %1097 = vmatprep.subr.mxu0 0.0
        %1098 = vmatpush1.msra.mxu0 0.0
        %1099 = vmatprep.subr.mxu0 0.0
        %1100 = vmatpush1.msra.mxu0 0.0
        %1101 = vmatprep.mubr.f32.mxu0 0.0
        %1102 = vmatmul.mubr.f32.gmra.mrb[0].mxu0 %v1019
        %v1103 = vpop.f32.mrb[0].mxu0
        %v1104 = vadd.f32 0.0, %v1103
        %v1105 = vpop.f32.mrb[0].mxu0
        %1106 = vdwg.mxu0
        %1107 = vst.msk [vmem:[%s381] sm:$0xff] %vm556, %v1104
        %s1108 = sand.u32 %s234, 1
        %s1109 = scalar_lea.sflag [#allocation6], %s1108
        %s1110 = sand.u32 %s234, 1
        %s1111 = smul.addr %s1110, 8
        %s1112 = scalar_lea.vmem [#allocation5], %s1111
        %s1113 = sand.u32 %s262, 1
        %s1114 = scalar_lea.sflag [#allocation8], %s1113
        %s1115 = sand.u32 %s262, 1
        %s1116 = smul.addr %s1115, 8
        %s1117 = scalar_lea.vmem [#allocation7], %s1116
        // Predicated region
        $region57: #{tpu_custom_call.1} parent=51 // pred_check
          %p1118 = pneg %p244
        $region58: #{tpu_custom_call.1} parent=51 // pred_check_branch
          %1120 = sbr.rel (%p1118) target = $region60
        $region59: #{tpu_custom_call.1} parent=51 // pred_region
          %s1122 = ssub.s32 128, 128
          %1123 = vsyncadd %s1109, %s1122
          %s1124 = sadd.s32 %s32, %s31
          %s1125 = smul.addr %s1124, 128
          %s1126 = scalar_lea.hbm %s8, %s1125
          %s1128 = sshll.u32 %s1112, 4
          %s1129 = int_to_ptr.vmem [resolvable:$true] %s1128
          %1131 = dma.vmem_to_hbm [thread:$0]  %s1129, 128, %s1126, %s1109
        $region60: #{tpu_custom_call.1} parent=51 // pred_fallthru
          _
        // Predicated region
        $region61: #{tpu_custom_call.1} parent=51 // pred_check
          %p1132 = pneg %p272
        $region62: #{tpu_custom_call.1} parent=51 // pred_check_branch
          %1134 = sbr.rel (%p1132) target = $region64
        $region63: #{tpu_custom_call.1} parent=51 // pred_region
          %s1136 = ssub.s32 128, 128
          %1137 = vsyncadd %s1114, %s1136
          %s1138 = sadd.s32 %s32, %s31
          %s1139 = smul.addr %s1138, 128
          %s1140 = scalar_lea.hbm %s9, %s1139
          %s1142 = sshll.u32 %s1117, 4
          %s1143 = int_to_ptr.vmem [resolvable:$true] %s1142
          %1145 = dma.vmem_to_hbm [thread:$0]  %s1143, 128, %s1140, %s1114
        $region64: #{tpu_custom_call.1} parent=51 // pred_fallthru
          _
      $region52: #{tpu_custom_call.1} parent=5 // pred_fallthru
        _
      %p1146 = scmp.le.s32.totalorder 2, %s22
      // Predicated region
      $region65: #{tpu_custom_call.1} parent=5 // pred_check
        %p1147 = pneg %p1146
      $region66: #{tpu_custom_call.1} parent=5 // pred_check_branch
        %1149 = sbr.rel (%p1147) target = $region68
      $region67: #{tpu_custom_call.1} parent=5 // pred_region
        %s1150 = ssub.s32 %s22, 2
        // Predicated region
        $region69: #{tpu_custom_call.1} parent=67 // pred_check
          %p1151 = pneg %p250
        $region70: #{tpu_custom_call.1} parent=67 // pred_check_branch
          %1153 = sbr.rel (%p1151) target = $region72
        $region71: #{tpu_custom_call.1} parent=67 // pred_region
          %s1154 = sand.u32 %s235, 1
          %s1155 = scalar_lea.sflag [#allocation6], %s1154
          %s1156 = sand.u32 %s235, 1
          %s1157 = smul.addr %s1156, 8
          %s1158 = scalar_lea.vmem [#allocation5], %s1157
          %1159 = dma.done %s1155, 128
        $region72: #{tpu_custom_call.1} parent=67 // pred_fallthru
          _
        // Predicated region
        $region73: #{tpu_custom_call.1} parent=67 // pred_check
          %p1160 = pneg %p278
        $region74: #{tpu_custom_call.1} parent=67 // pred_check_branch
          %1162 = sbr.rel (%p1160) target = $region76
        $region75: #{tpu_custom_call.1} parent=67 // pred_region
          %s1163 = sand.u32 %s263, 1
          %s1164 = scalar_lea.sflag [#allocation8], %s1163
          %s1165 = sand.u32 %s263, 1
          %s1166 = smul.addr %s1165, 8
          %s1167 = scalar_lea.vmem [#allocation7], %s1166
          %1168 = dma.done %s1164, 128
        $region76: #{tpu_custom_call.1} parent=67 // pred_fallthru
          _
      $region68: #{tpu_custom_call.1} parent=5 // pred_fallthru
        _
    $region6: #{tpu_custom_call.1} parent=1 // loop_footer
      %s26 = sadd.s32 1, %s22
    $region7: #{tpu_custom_call.1} parent=1 // loop_footer_branch
      %21 = sbr.rel target = $region3
    $region8: #{tpu_custom_call.1} parent=1 // loop_exit
      _
    %1169 = vsyncpa [#allocation6], 1
    %s1170 = scalar_lea.sflag [#allocation6], 1
    %1171 = vsyncpa %s1170, 1
    %1172 = vsyncpa [#allocation8], 1
    %s1173 = scalar_lea.sflag [#allocation8], 1
    %1174 = vsyncpa %s1173, 1

</llo_original>
